<compile_context>
chip_gen: v7x
topology: tpu7x:2x2x1
jax: 0.10.0
libtpu: 0.0.40
codegen_flags: <defaults>
</compile_context>

<pallas_src>
import jax
import jax.numpy as jnp
from jax.experimental import pallas as pl
from jax.experimental.pallas import tpu as pltpu

N, W = 4, 8  # batch and feature width implied by Linear(8,6)/Linear(8,8)/matmul


def layer_kernel(x_ref, p_ref, out_ref):
    # --- static views into the packed parameter slab (single VMEM input) ---
    w1t = p_ref[0:8, 0:6]      # Linear(8,6).weight.T   (8, 6)
    w3t = p_ref[8:16, 0:8]     # Linear(8,8).weight.T   (8, 8)
    w2t = p_ref[16:22, 0:4]    # Linear(6,4).weight.T   (6, 4)
    b1 = p_ref[22:23, 0:6]     # Linear(8,6).bias       (1, 6)
    b3 = p_ref[23:24, 0:8]     # Linear(8,8).bias       (1, 8)
    wc = p_ref[24:25, 0:8]     # conv scalar weight, pre-broadcast row (1, 8)
    bc = p_ref[25:26, 0:8]     # conv scalar bias,   pre-broadcast row (1, 8)

    x = x_ref[...]                                       # (4, 8)

    # v1 = conv2d(x1): 1x1 conv, 1->1 channel == scalar affine (VPU only)
    v1 = x * wc + bc                                     # (4, 8)

    # v2 = flatten(v1) (C=H=1 so already (4,8)); v4 = relu(v2); v6 = relu(v4)
    v6 = jnp.maximum(v1, 0.0)                            # (4, 8)

    # v3 = linear1(v1): (4, 8) @ (8, 6) + b1
    v3 = jnp.dot(v1, w1t, preferred_element_type=jnp.float32) + b1      # (4, 6)

    # v7 = (v3 @ w2.T) @ v6 re-associated as v3 @ (w2.T @ v6);
    # `tmp` does not depend on v3, so the MXU critical path is 2 dots, not 3.
    # (On v6e/v7x a VPU broadcast-FMA path could replace these tiny dots; kept
    #  on the MXU for simplicity since it lowers cleanly at these shapes.)
    tmp = jnp.dot(w2t, v6, preferred_element_type=jnp.float32)          # (6, 8)
    v7 = jnp.dot(v3, tmp, preferred_element_type=jnp.float32)           # (4, 8)

    # v8 = flatten(v6) = v6 ; v9 = linear3(v8)
    v9 = jnp.dot(v6, w3t, preferred_element_type=jnp.float32) + b3      # (4, 8)

    # out[n, m, k] = v7[n, k] + v6[m, k] + v9[m, k]
    # (matches the torch broadcast (4,1,1,8) + (4,8) + (4,8) -> (4,1,4,8);
    #  singleton channel dim restored in the wrapper)
    s = v6 + v9                                          # (4, 8)
    blocks = [(v7[n:n + 1, :] + s)[None, :, :] for n in range(N)]  # (1, 4, 8) each
    out_ref[...] = jnp.concatenate(blocks, axis=0)       # single (4, 4, 8) store


def init_params(key):
    ks = jax.random.split(key, 7)
    conv_w = jax.random.normal(ks[0], (1,), jnp.float32) * 0.5   # Conv2d(1,1,(1,1)) weight (scalar)
    conv_b = jax.random.normal(ks[1], (1,), jnp.float32) * 0.1   # Conv2d bias (scalar)
    w1 = jax.random.normal(ks[2], (6, 8), jnp.float32) * 0.3     # Linear(8, 6).weight
    b1 = jax.random.normal(ks[3], (6,), jnp.float32) * 0.1       # Linear(8, 6).bias
    w2 = jax.random.normal(ks[4], (4, 6), jnp.float32) * 0.3     # Linear(6, 4, bias=False).weight
    w3 = jax.random.normal(ks[5], (8, 8), jnp.float32) * 0.3     # Linear(8, 8).weight
    b3 = jax.random.normal(ks[6], (8,), jnp.float32) * 0.1       # Linear(8, 8).bias
    return conv_w, conv_b, w1, b1, w2, w3, b3


def pack_params(params):
    """Pack all parameters into one (32, 8) f32 slab (single DMA, static views)."""
    conv_w, conv_b, w1, b1, w2, w3, b3 = params
    slab = jnp.zeros((32, 8), jnp.float32)
    slab = slab.at[0:8, 0:6].set(w1.T)        # (8, 6)
    slab = slab.at[8:16, 0:8].set(w3.T)       # (8, 8)
    slab = slab.at[16:22, 0:4].set(w2.T)      # (6, 4)
    slab = slab.at[22, 0:6].set(b1)           # (6,)
    slab = slab.at[23, 0:8].set(b3)           # (8,)
    slab = slab.at[24, :].set(conv_w[0])      # scalar, lane-broadcast
    slab = slab.at[25, :].set(conv_b[0])      # scalar, lane-broadcast
    return slab


def layer_forward(x, params):
    """x: (N, 1, 1, 8) NCHW.  Returns (N, 1, N, 8), matching the torch module."""
    n, c, h, w = x.shape
    assert c == 1 and h == 1 and w == W and n == N  # module is hard-wired to N==4
    x2d = x.reshape(n, w)
    slab = pack_params(params)

    out3 = pl.pallas_call(
        layer_kernel,
        out_shape=jax.ShapeDtypeStruct((N, N, W), jnp.float32),
        in_specs=[
            pl.BlockSpec(memory_space=pltpu.MemorySpace.VMEM),   # x2d  (4, 8)
            pl.BlockSpec(memory_space=pltpu.MemorySpace.VMEM),   # slab (32, 8)
        ],
        out_specs=pl.BlockSpec(memory_space=pltpu.MemorySpace.VMEM),
    )(x2d, slab)

    return out3.reshape(N, 1, N, W)


def ref_forward(x, params):
    """Pure-JAX reference mirroring the PyTorch forward exactly."""
    conv_w, conv_b, w1, b1, w2, w3, b3 = params
    v1 = x * conv_w[0] + conv_b[0]                 # (4,1,1,8)
    v2 = v1.reshape(v1.shape[0], -1)               # (4,8)
    v3 = v1 @ w1.T + b1                            # (4,1,1,6)
    v4 = jnp.maximum(v2, 0.0)
    v5 = v3 @ w2.T                                 # (4,1,1,4)
    v6 = jnp.maximum(v4, 0.0)
    v7 = jnp.matmul(v5, v6)                        # (4,1,1,8)
    v8 = v6                                        # (4,8)
    v9 = v8 @ w3.T + b3                            # (4,8)
    return v7 + v8 + v9                            # (4,1,4,8)


if __name__ == "__main__":
    key = jax.random.PRNGKey(0)
    pkey, xkey = jax.random.split(key)
    params = init_params(pkey)
    x1 = jax.random.normal(xkey, (N, 1, 1, W), jnp.float32)

    out = layer_forward(x1, params)
    out = jax.block_until_ready(out)

    ref = ref_forward(x1, params)
    assert out.shape == (4, 1, 4, 8), out.shape
    assert jnp.allclose(out, ref, atol=1e-4, rtol=1e-4), "mismatch vs reference"

    print("KERNEL_OK")
</pallas_src>

<mosaic_0001>
module attributes {stable_mosaic.version = 11 : i64} {
  func.func @layer_kernel(%arg0: memref<4x8xf32, #tpu.memory_space<vmem>>, %arg1: memref<32x8xf32, #tpu.memory_space<vmem>>, %arg2: memref<4x4x8xf32, #tpu.memory_space<vmem>>) attributes {dimension_semantics = [], scalar_prefetch = 0 : i64, scratch_operands = 0 : i64, tpu.core_type = #tpu.core_type<tc>} {
    %c0 = arith.constant 0 : index
    %c0_0 = arith.constant 0 : index
    %0 = vector.load %arg1[%c0, %c0_0] : memref<32x8xf32, #tpu.memory_space<vmem>>, vector<8x6xf32>
    %c8 = arith.constant 8 : index
    %c0_1 = arith.constant 0 : index
    %1 = vector.load %arg1[%c8, %c0_1] : memref<32x8xf32, #tpu.memory_space<vmem>>, vector<8x8xf32>
    %c16 = arith.constant 16 : index
    %c0_2 = arith.constant 0 : index
    %2 = vector.load %arg1[%c16, %c0_2] : memref<32x8xf32, #tpu.memory_space<vmem>>, vector<6x4xf32>
    %c22 = arith.constant 22 : index
    %c0_3 = arith.constant 0 : index
    %3 = vector.load %arg1[%c22, %c0_3] : memref<32x8xf32, #tpu.memory_space<vmem>>, vector<1x6xf32>
    %c23 = arith.constant 23 : index
    %c0_4 = arith.constant 0 : index
    %4 = vector.load %arg1[%c23, %c0_4] : memref<32x8xf32, #tpu.memory_space<vmem>>, vector<1x8xf32>
    %c24 = arith.constant 24 : index
    %c0_5 = arith.constant 0 : index
    %5 = vector.load %arg1[%c24, %c0_5] : memref<32x8xf32, #tpu.memory_space<vmem>>, vector<1x8xf32>
    %c25 = arith.constant 25 : index
    %c0_6 = arith.constant 0 : index
    %6 = vector.load %arg1[%c25, %c0_6] : memref<32x8xf32, #tpu.memory_space<vmem>>, vector<1x8xf32>
    %c0_7 = arith.constant 0 : index
    %c0_8 = arith.constant 0 : index
    %7 = vector.load %arg0[%c0_7, %c0_8] : memref<4x8xf32, #tpu.memory_space<vmem>>, vector<4x8xf32>
    %8 = vector.broadcast %5 : vector<1x8xf32> to vector<4x8xf32>
    %9 = arith.mulf %7, %8 : vector<4x8xf32>
    %10 = vector.broadcast %6 : vector<1x8xf32> to vector<4x8xf32>
    %11 = arith.addf %9, %10 : vector<4x8xf32>
    %cst = arith.constant 0.000000e+00 : f32
    %12 = vector.broadcast %cst : f32 to vector<4x8xf32>
    %13 = arith.maximumf %11, %12 : vector<4x8xf32>
    %cst_9 = arith.constant dense<0.000000e+00> : vector<4x6xf32>
    %14 = tpu.matmul %11, %0, %cst_9 {dimension_numbers = #tpu.dot_dimension_numbers<[1], [0], [0], [1], [0, 0, 1, 1], [], []>} : vector<4x8xf32>, vector<8x6xf32>, vector<4x6xf32> -> vector<4x6xf32>
    %15 = vector.broadcast %3 : vector<1x6xf32> to vector<4x6xf32>
    %16 = arith.addf %14, %15 : vector<4x6xf32>
    %cst_10 = arith.constant dense<0.000000e+00> : vector<6x8xf32>
    %17 = tpu.matmul %2, %13, %cst_10 {dimension_numbers = #tpu.dot_dimension_numbers<[1], [0], [0], [1], [0, 0, 1, 1], [], []>} : vector<6x4xf32>, vector<4x8xf32>, vector<6x8xf32> -> vector<6x8xf32>
    %cst_11 = arith.constant dense<0.000000e+00> : vector<4x8xf32>
    %18 = tpu.matmul %16, %17, %cst_11 {dimension_numbers = #tpu.dot_dimension_numbers<[1], [0], [0], [1], [0, 0, 1, 1], [], []>} : vector<4x6xf32>, vector<6x8xf32>, vector<4x8xf32> -> vector<4x8xf32>
    %cst_12 = arith.constant dense<0.000000e+00> : vector<4x8xf32>
    %19 = tpu.matmul %13, %1, %cst_12 {dimension_numbers = #tpu.dot_dimension_numbers<[1], [0], [0], [1], [0, 0, 1, 1], [], []>} : vector<4x8xf32>, vector<8x8xf32>, vector<4x8xf32> -> vector<4x8xf32>
    %20 = vector.broadcast %4 : vector<1x8xf32> to vector<4x8xf32>
    %21 = arith.addf %19, %20 : vector<4x8xf32>
    %22 = arith.addf %13, %21 : vector<4x8xf32>
    %23 = vector.extract_strided_slice %18 {offsets = [0, 0], sizes = [1, 8], strides = [1, 1]} : vector<4x8xf32> to vector<1x8xf32>
    %24 = vector.broadcast %23 : vector<1x8xf32> to vector<4x8xf32>
    %25 = arith.addf %24, %22 : vector<4x8xf32>
    %26 = vector.shape_cast %25 : vector<4x8xf32> to vector<1x4x8xf32>
    %27 = vector.extract_strided_slice %18 {offsets = [1, 0], sizes = [1, 8], strides = [1, 1]} : vector<4x8xf32> to vector<1x8xf32>
    %28 = vector.broadcast %27 : vector<1x8xf32> to vector<4x8xf32>
    %29 = arith.addf %28, %22 : vector<4x8xf32>
    %30 = vector.shape_cast %29 : vector<4x8xf32> to vector<1x4x8xf32>
    %31 = vector.extract_strided_slice %18 {offsets = [2, 0], sizes = [1, 8], strides = [1, 1]} : vector<4x8xf32> to vector<1x8xf32>
    %32 = vector.broadcast %31 : vector<1x8xf32> to vector<4x8xf32>
    %33 = arith.addf %32, %22 : vector<4x8xf32>
    %34 = vector.shape_cast %33 : vector<4x8xf32> to vector<1x4x8xf32>
    %35 = vector.extract_strided_slice %18 {offsets = [3, 0], sizes = [1, 8], strides = [1, 1]} : vector<4x8xf32> to vector<1x8xf32>
    %36 = vector.broadcast %35 : vector<1x8xf32> to vector<4x8xf32>
    %37 = arith.addf %36, %22 : vector<4x8xf32>
    %38 = vector.shape_cast %37 : vector<4x8xf32> to vector<1x4x8xf32>
    %39 = tpu.concatenate %26, %30, %34, %38 in 0 : vector<1x4x8xf32>, vector<1x4x8xf32>, vector<1x4x8xf32>, vector<1x4x8xf32> -> vector<4x4x8xf32>
    %c0_13 = arith.constant 0 : index
    %c0_14 = arith.constant 0 : index
    %c0_15 = arith.constant 0 : index
    %40 = vector.load %arg2[%c0_13, %c0_14, %c0_15] : memref<4x4x8xf32, #tpu.memory_space<vmem>>, vector<4x4x8xf32>
    tpu.vector_store %arg2[%c0_13, %c0_14, %c0_15], %39 {strides = array<i32>} : memref<4x4x8xf32, #tpu.memory_space<vmem>>, vector<4x4x8xf32>,
    return
  }
}

</mosaic_0001>

<llo_original>
// kernel: tpu_custom_call.1
$region0: #{tpu_custom_call.1}
  #allocation0 [shape = 'u32[]', space=smem, size = 0x4, offset = 0x4, fixed_abs, tag = 'smem constant byte address 0x4 - core index']
  #allocation1 [shape = 'u32[144,128]{1,0:T(1,128)}', space=vmem, size = 0x12000, scoped, tag = 'internal scratch']
  %s0 = inlined_call_operand.vmem [shape: f32[4,8], index: 0, kind: input, shape index: {}]
  %s1 = inlined_call_operand.vmem [shape: f32[32,8], index: 1, kind: input, shape index: {}]
  %s2 = inlined_call_operand.hbm [shape: f32[4,4,8], index: 2, kind: output, shape index: {}]
  %s3 = sld [smem:[#allocation0]]
  $region18: #{tpu_custom_call.1} parent=0
    _
  %s5 = ssub.s32 1, %s3
  %s6 = scalar_select 0, %s5, %s3
  $region1: #{tpu_custom_call.1} parent=0
    #allocation2 [shape = 'u8[8192]{0}', space=vmem, size = 0x2000, scoped, tag = 'output window, operand 0, single buffered']
    #allocation3 [shape = 's32[1]{0}', space=sflag, size = 0x4, scoped, tag = 'scoped memory for tpu_custom_call.1']
    %7 = vsyncpa [#allocation3], 0
    // Predicated region
    $region2: #{tpu_custom_call.1} parent=1 // pred_check
      _
    $region3: #{tpu_custom_call.1} parent=1 // pred_check_branch
      %9 = sbr.rel (0) target = $region5
    $region4: #{tpu_custom_call.1} parent=1 // pred_region
      _
    $region5: #{tpu_custom_call.1} parent=1 // pred_fallthru
      _
    // Predicated region
    $region6: #{tpu_custom_call.1} parent=1 // pred_check
      _
    $region7: #{tpu_custom_call.1} parent=1 // pred_check_branch
      %11 = sbr.rel (0) target = $region9
    $region8: #{tpu_custom_call.1} parent=1 // pred_region
      _
    $region9: #{tpu_custom_call.1} parent=1 // pred_fallthru
      _
    %v12 = vld [vmem:[%s1] sm:$0xff]
    %v13 = vld [vmem:[%s1 + $0x8] sm:$0xff]
    %v14 = vld [vmem:[%s1 + $0x10] sm:$0x3f]
    %v15 = vld [vmem:[%s1 + $0x16] sm:$0x1]
    %v16 = vld [vmem:[%s1 + $0x17] sm:$0x1]
    %v17 = vld [vmem:[%s1 + $0x18] sm:$0x1]
    %v18 = vld [vmem:[%s1 + $0x19] sm:$0x1]
    %v19 = vld [vmem:[%s0] sm:$0xf]
    %v20 = vlaneseq
    %v21 = vshrl.u32 %v20, 7
    %v22 = vsub.s32 0, %v21
    %v23 = vrot.slane %v17, %v22
    %v24 = vmul.f32 %v19, %v23
    %v25 = vlaneseq
    %v26 = vshrl.u32 %v25, 7
    %v27 = vsub.s32 0, %v26
    %v28 = vrot.slane %v18, %v27
    %v29 = vadd.f32 %v24, %v28
    %v30 = vmax.f32 %v29, 0.0
    %v31 = vlaneseq
    %v32 = vshrl.u32 %v31, 7
    %v33 = vsub.s32 0, %v32
    %v34 = vrot.slane %v15, %v33
    %vm35 = vcmask 64512
    %v37 = vsel %vm35, %v29, 0
    %39 = vmatprep.subr.mxu0 0.0
    %40 = vmatpush1.msra.mxu0 %v12
    %41 = vmatprep.subr.mxu0 0.0
    %42 = vmatpush1.msra.mxu0 0.0
    %43 = vmatprep.subr.mxu0 0.0
    %44 = vmatpush1.msra.mxu0 0.0
    %45 = vmatprep.subr.mxu0 0.0
    %46 = vmatpush1.msra.mxu0 0.0
    %47 = vmatprep.subr.mxu0 0.0
    %48 = vmatpush1.msra.mxu0 0.0
    %49 = vmatprep.subr.mxu0 0.0
    %50 = vmatpush1.msra.mxu0 0.0
    %51 = vmatprep.subr.mxu0 0.0
    %52 = vmatpush1.msra.mxu0 0.0
    %53 = vmatprep.subr.mxu0 0.0
    %54 = vmatpush1.msra.mxu0 0.0
    %55 = vmatprep.subr.mxu0 0.0
    %56 = vmatpush1.msra.mxu0 0.0
    %57 = vmatprep.subr.mxu0 0.0
    %58 = vmatpush1.msra.mxu0 0.0
    %59 = vmatprep.subr.mxu0 0.0
    %60 = vmatpush1.msra.mxu0 0.0
    %61 = vmatprep.subr.mxu0 0.0
    %62 = vmatpush1.msra.mxu0 0.0
    %63 = vmatprep.subr.mxu0 0.0
    %64 = vmatpush1.msra.mxu0 0.0
    %65 = vmatprep.subr.mxu0 0.0
    %66 = vmatpush1.msra.mxu0 0.0
    %67 = vmatprep.subr.mxu0 0.0
    %68 = vmatpush1.msra.mxu0 0.0
    %69 = vmatprep.subr.mxu0 0.0
    %70 = vmatpush1.msra.mxu0 0.0
    %71 = vmatprep.subr.mxu0 0.0
    %72 = vmatpush1.msra.mxu0 0.0
    %73 = vmatprep.subr.mxu0 0.0
    %74 = vmatpush1.msra.mxu0 0.0
    %75 = vmatprep.subr.mxu0 0.0
    %76 = vmatpush1.msra.mxu0 0.0
    %77 = vmatprep.subr.mxu0 0.0
    %78 = vmatpush1.msra.mxu0 0.0
    %79 = vmatprep.subr.mxu0 0.0
    %80 = vmatpush1.msra.mxu0 0.0
    %81 = vmatprep.subr.mxu0 0.0
    %82 = vmatpush1.msra.mxu0 0.0
    %83 = vmatprep.subr.mxu0 0.0
    %84 = vmatpush1.msra.mxu0 0.0
    %85 = vmatprep.subr.mxu0 0.0
    %86 = vmatpush1.msra.mxu0 0.0
    %87 = vmatprep.subr.mxu0 0.0
    %88 = vmatpush1.msra.mxu0 0.0
    %89 = vmatprep.subr.mxu0 0.0
    %90 = vmatpush1.msra.mxu0 0.0
    %91 = vmatprep.subr.mxu0 0.0
    %92 = vmatpush1.msra.mxu0 0.0
    %93 = vmatprep.subr.mxu0 0.0
    %94 = vmatpush1.msra.mxu0 0.0
    %95 = vmatprep.subr.mxu0 0.0
    %96 = vmatpush1.msra.mxu0 0.0
    %97 = vmatprep.subr.mxu0 0.0
    %98 = vmatpush1.msra.mxu0 0.0
    %99 = vmatprep.subr.mxu0 0.0
    %100 = vmatpush1.msra.mxu0 0.0
    %101 = vmatprep.subr.mxu0 0.0
    %102 = vmatpush1.msra.mxu0 0.0
    %103 = vmatprep.mubr.f32.mxu0 0.0
    %104 = vmatmul.mubr.f32.gmra.mrb[0].mxu0 %v37
    %v105 = vpop.f32.mrb[0].mxu0
    %v106 = vadd.f32 %v34, %v105
    %v107 = vpop.f32.mrb[0].mxu0
    %108 = vdwg.mxu0
    %vm109 = vcmask 31744
    %v111 = vsel %vm109, %v14, 0
    %vm113 = vcmask 1043456
    %v115 = vsel %vm113, %v30, 0
    %117 = vmatprep.subr.mxu0 0.0
    %118 = vmatpush1.msra.mxu0 %v115
    %119 = vmatprep.subr.mxu0 0.0
    %120 = vmatpush1.msra.mxu0 0.0
    %121 = vmatprep.subr.mxu0 0.0
    %122 = vmatpush1.msra.mxu0 0.0
    %123 = vmatprep.subr.mxu0 0.0
    %124 = vmatpush1.msra.mxu0 0.0
    %125 = vmatprep.subr.mxu0 0.0
    %126 = vmatpush1.msra.mxu0 0.0
    %127 = vmatprep.subr.mxu0 0.0
    %128 = vmatpush1.msra.mxu0 0.0
    %129 = vmatprep.subr.mxu0 0.0
    %130 = vmatpush1.msra.mxu0 0.0
    %131 = vmatprep.subr.mxu0 0.0
    %132 = vmatpush1.msra.mxu0 0.0
    %133 = vmatprep.subr.mxu0 0.0
    %134 = vmatpush1.msra.mxu0 0.0
    %135 = vmatprep.subr.mxu0 0.0
    %136 = vmatpush1.msra.mxu0 0.0
    %137 = vmatprep.subr.mxu0 0.0
    %138 = vmatpush1.msra.mxu0 0.0
    %139 = vmatprep.subr.mxu0 0.0
    %140 = vmatpush1.msra.mxu0 0.0
    %141 = vmatprep.subr.mxu0 0.0
    %142 = vmatpush1.msra.mxu0 0.0
    %143 = vmatprep.subr.mxu0 0.0
    %144 = vmatpush1.msra.mxu0 0.0
    %145 = vmatprep.subr.mxu0 0.0
    %146 = vmatpush1.msra.mxu0 0.0
    %147 = vmatprep.subr.mxu0 0.0
    %148 = vmatpush1.msra.mxu0 0.0
    %149 = vmatprep.subr.mxu0 0.0
    %150 = vmatpush1.msra.mxu0 0.0
    %151 = vmatprep.subr.mxu0 0.0
    %152 = vmatpush1.msra.mxu0 0.0
    %153 = vmatprep.subr.mxu0 0.0
    %154 = vmatpush1.msra.mxu0 0.0
    %155 = vmatprep.subr.mxu0 0.0
    %156 = vmatpush1.msra.mxu0 0.0
    %157 = vmatprep.subr.mxu0 0.0
    %158 = vmatpush1.msra.mxu0 0.0
    %159 = vmatprep.subr.mxu0 0.0
    %160 = vmatpush1.msra.mxu0 0.0
    %161 = vmatprep.subr.mxu0 0.0
    %162 = vmatpush1.msra.mxu0 0.0
    %163 = vmatprep.subr.mxu0 0.0
    %164 = vmatpush1.msra.mxu0 0.0
    %165 = vmatprep.subr.mxu0 0.0
    %166 = vmatpush1.msra.mxu0 0.0
    %167 = vmatprep.subr.mxu0 0.0
    %168 = vmatpush1.msra.mxu0 0.0
    %169 = vmatprep.subr.mxu0 0.0
    %170 = vmatpush1.msra.mxu0 0.0
    %171 = vmatprep.subr.mxu0 0.0
    %172 = vmatpush1.msra.mxu0 0.0
    %173 = vmatprep.subr.mxu0 0.0
    %174 = vmatpush1.msra.mxu0 0.0
    %175 = vmatprep.subr.mxu0 0.0
    %176 = vmatpush1.msra.mxu0 0.0
    %177 = vmatprep.subr.mxu0 0.0
    %178 = vmatpush1.msra.mxu0 0.0
    %179 = vmatprep.subr.mxu0 0.0
    %180 = vmatpush1.msra.mxu0 0.0
    %181 = vmatprep.mubr.f32.mxu0 0.0
    %182 = vmatmul.mubr.f32.gmra.mrb[0].mxu0 %v111
    %v183 = vpop.f32.mrb[0].mxu0
    %v184 = vadd.f32 0.0, %v183
    %v185 = vpop.f32.mrb[0].mxu0
    %186 = vdwg.mxu0
    %vm187 = vcmask 48128
    %v189 = vsel %vm187, %v106, 0
    %vm191 = vcmask 1045504
    %v193 = vsel %vm191, %v184, 0
    %195 = vmatprep.subr.mxu0 0.0
    %196 = vmatpush1.msra.mxu0 %v193
    %197 = vmatprep.subr.mxu0 0.0
    %198 = vmatpush1.msra.mxu0 0.0
    %199 = vmatprep.subr.mxu0 0.0
    %200 = vmatpush1.msra.mxu0 0.0
    %201 = vmatprep.subr.mxu0 0.0
    %202 = vmatpush1.msra.mxu0 0.0
    %203 = vmatprep.subr.mxu0 0.0
    %204 = vmatpush1.msra.mxu0 0.0
    %205 = vmatprep.subr.mxu0 0.0
    %206 = vmatpush1.msra.mxu0 0.0
    %207 = vmatprep.subr.mxu0 0.0
    %208 = vmatpush1.msra.mxu0 0.0
    %209 = vmatprep.subr.mxu0 0.0
    %210 = vmatpush1.msra.mxu0 0.0
    %211 = vmatprep.subr.mxu0 0.0
    %212 = vmatpush1.msra.mxu0 0.0
    %213 = vmatprep.subr.mxu0 0.0
    %214 = vmatpush1.msra.mxu0 0.0
    %215 = vmatprep.subr.mxu0 0.0
    %216 = vmatpush1.msra.mxu0 0.0
    %217 = vmatprep.subr.mxu0 0.0
    %218 = vmatpush1.msra.mxu0 0.0
    %219 = vmatprep.subr.mxu0 0.0
    %220 = vmatpush1.msra.mxu0 0.0
    %221 = vmatprep.subr.mxu0 0.0
    %222 = vmatpush1.msra.mxu0 0.0
    %223 = vmatprep.subr.mxu0 0.0
    %224 = vmatpush1.msra.mxu0 0.0
    %225 = vmatprep.subr.mxu0 0.0
    %226 = vmatpush1.msra.mxu0 0.0
    %227 = vmatprep.subr.mxu0 0.0
    %228 = vmatpush1.msra.mxu0 0.0
    %229 = vmatprep.subr.mxu0 0.0
    %230 = vmatpush1.msra.mxu0 0.0
    %231 = vmatprep.subr.mxu0 0.0
    %232 = vmatpush1.msra.mxu0 0.0
    %233 = vmatprep.subr.mxu0 0.0
    %234 = vmatpush1.msra.mxu0 0.0
    %235 = vmatprep.subr.mxu0 0.0
    %236 = vmatpush1.msra.mxu0 0.0
    %237 = vmatprep.subr.mxu0 0.0
    %238 = vmatpush1.msra.mxu0 0.0
    %239 = vmatprep.subr.mxu0 0.0
    %240 = vmatpush1.msra.mxu0 0.0
    %241 = vmatprep.subr.mxu0 0.0
    %242 = vmatpush1.msra.mxu0 0.0
    %243 = vmatprep.subr.mxu0 0.0
    %244 = vmatpush1.msra.mxu0 0.0
    %245 = vmatprep.subr.mxu0 0.0
    %246 = vmatpush1.msra.mxu0 0.0
    %247 = vmatprep.subr.mxu0 0.0
    %248 = vmatpush1.msra.mxu0 0.0
    %249 = vmatprep.subr.mxu0 0.0
    %250 = vmatpush1.msra.mxu0 0.0
    %251 = vmatprep.subr.mxu0 0.0
    %252 = vmatpush1.msra.mxu0 0.0
    %253 = vmatprep.subr.mxu0 0.0
    %254 = vmatpush1.msra.mxu0 0.0
    %255 = vmatprep.subr.mxu0 0.0
    %256 = vmatpush1.msra.mxu0 0.0
    %257 = vmatprep.subr.mxu0 0.0
    %258 = vmatpush1.msra.mxu0 0.0
    %259 = vmatprep.mubr.f32.mxu0 0.0
    %260 = vmatmul.mubr.f32.gmra.mrb[0].mxu0 %v189
    %v261 = vpop.f32.mrb[0].mxu0
    %v262 = vadd.f32 0.0, %v261
    %v263 = vpop.f32.mrb[0].mxu0
    %264 = vdwg.mxu0
    %v265 = vlaneseq
    %v266 = vshrl.u32 %v265, 7
    %v267 = vsub.s32 0, %v266
    %v268 = vrot.slane %v16, %v267
    %v269 = vsel %vm35, %v30, 0
    %271 = vmatprep.subr.mxu0 0.0
    %272 = vmatpush1.msra.mxu0 %v13
    %273 = vmatprep.subr.mxu0 0.0
    %274 = vmatpush1.msra.mxu0 0.0
    %275 = vmatprep.subr.mxu0 0.0
    %276 = vmatpush1.msra.mxu0 0.0
    %277 = vmatprep.subr.mxu0 0.0
    %278 = vmatpush1.msra.mxu0 0.0
    %279 = vmatprep.subr.mxu0 0.0
    %280 = vmatpush1.msra.mxu0 0.0
    %281 = vmatprep.subr.mxu0 0.0
    %282 = vmatpush1.msra.mxu0 0.0
    %283 = vmatprep.subr.mxu0 0.0
    %284 = vmatpush1.msra.mxu0 0.0
    %285 = vmatprep.subr.mxu0 0.0
    %286 = vmatpush1.msra.mxu0 0.0
    %287 = vmatprep.subr.mxu0 0.0
    %288 = vmatpush1.msra.mxu0 0.0
    %289 = vmatprep.subr.mxu0 0.0
    %290 = vmatpush1.msra.mxu0 0.0
    %291 = vmatprep.subr.mxu0 0.0
    %292 = vmatpush1.msra.mxu0 0.0
    %293 = vmatprep.subr.mxu0 0.0
    %294 = vmatpush1.msra.mxu0 0.0
    %295 = vmatprep.subr.mxu0 0.0
    %296 = vmatpush1.msra.mxu0 0.0
    %297 = vmatprep.subr.mxu0 0.0
    %298 = vmatpush1.msra.mxu0 0.0
    %299 = vmatprep.subr.mxu0 0.0
    %300 = vmatpush1.msra.mxu0 0.0
    %301 = vmatprep.subr.mxu0 0.0
    %302 = vmatpush1.msra.mxu0 0.0
    %303 = vmatprep.subr.mxu0 0.0
    %304 = vmatpush1.msra.mxu0 0.0
    %305 = vmatprep.subr.mxu0 0.0
    %306 = vmatpush1.msra.mxu0 0.0
    %307 = vmatprep.subr.mxu0 0.0
    %308 = vmatpush1.msra.mxu0 0.0
    %309 = vmatprep.subr.mxu0 0.0
    %310 = vmatpush1.msra.mxu0 0.0
    %311 = vmatprep.subr.mxu0 0.0
    %312 = vmatpush1.msra.mxu0 0.0
    %313 = vmatprep.subr.mxu0 0.0
    %314 = vmatpush1.msra.mxu0 0.0
    %315 = vmatprep.subr.mxu0 0.0
    %316 = vmatpush1.msra.mxu0 0.0
    %317 = vmatprep.subr.mxu0 0.0
    %318 = vmatpush1.msra.mxu0 0.0
    %319 = vmatprep.subr.mxu0 0.0
    %320 = vmatpush1.msra.mxu0 0.0
    %321 = vmatprep.subr.mxu0 0.0
    %322 = vmatpush1.msra.mxu0 0.0
    %323 = vmatprep.subr.mxu0 0.0
    %324 = vmatpush1.msra.mxu0 0.0
    %325 = vmatprep.subr.mxu0 0.0
    %326 = vmatpush1.msra.mxu0 0.0
    %327 = vmatprep.subr.mxu0 0.0
    %328 = vmatpush1.msra.mxu0 0.0
    %329 = vmatprep.subr.mxu0 0.0
    %330 = vmatpush1.msra.mxu0 0.0
    %331 = vmatprep.subr.mxu0 0.0
    %332 = vmatpush1.msra.mxu0 0.0
    %333 = vmatprep.subr.mxu0 0.0
    %334 = vmatpush1.msra.mxu0 0.0
    %335 = vmatprep.mubr.f32.mxu0 0.0
    %336 = vmatmul.mubr.f32.gmra.mrb[0].mxu0 %v269
    %v337 = vpop.f32.mrb[0].mxu0
    %v338 = vadd.f32 %v268, %v337
    %v339 = vpop.f32.mrb[0].mxu0
    %340 = vdwg.mxu0
    %v341 = vadd.f32 %v30, %v338
    %v342 = vlaneseq
    %v343 = vshrl.u32 %v342, 7
    %v344 = vsub.s32 0, %v343
    %v345 = vrot.slane %v262, %v344
    %v346 = vadd.f32 %v345, %v341
    %v347 = vlaneseq
    %v348 = vshrl.u32 %v347, 7
    %v349 = vsub.s32 1, %v348
    %v350 = vrot.slane %v262, %v349
    %v351 = vadd.f32 %v350, %v341
    %v352 = vlaneseq
    %v353 = vshrl.u32 %v352, 7
    %v354 = vsub.s32 2, %v353
    %v355 = vrot.slane %v262, %v354
    %v356 = vadd.f32 %v355, %v341
    %v357 = vlaneseq
    %v358 = vshrl.u32 %v357, 7
    %v359 = vsub.s32 3, %v358
    %v360 = vrot.slane %v262, %v359
    %v361 = vadd.f32 %v360, %v341
    %vm362 = vcmask 60416
    %363 = vst.msk [vmem:[#allocation2] sm:$0xf] %vm362, %v346
    %364 = vst.msk [vmem:[#allocation2 + $0x4] sm:$0xf] %vm362, %v351
    %365 = vst.msk [vmem:[#allocation2 + $0x8] sm:$0xf] %vm362, %v356
    %366 = vst.msk [vmem:[#allocation2 + $0xc] sm:$0xf] %vm362, %v361
    // Predicated region
    $region10: #{tpu_custom_call.1} parent=1 // pred_check
      _
    $region11: #{tpu_custom_call.1} parent=1 // pred_check_branch
      %368 = sbr.rel (0) target = $region13
    $region12: #{tpu_custom_call.1} parent=1 // pred_region
      %s370 = ssub.s32 256, 256
      %371 = vsyncadd [#allocation3], %s370
      %s372 = sshll.u32 [#allocation2], 4
      %s373 = int_to_ptr.vmem [resolvable:$true] %s372
      %378 = dma.vmem_to_hbm [thread:$0]  %s373, 256, %s2, [#allocation3], 64, 64, 4
    $region13: #{tpu_custom_call.1} parent=1 // pred_fallthru
      _
    // Predicated region
    $region14: #{tpu_custom_call.1} parent=1 // pred_check
      _
    $region15: #{tpu_custom_call.1} parent=1 // pred_check_branch
      %380 = sbr.rel (0) target = $region17
    $region16: #{tpu_custom_call.1} parent=1 // pred_region
      %381 = dma.done [#allocation3], 256
    $region17: #{tpu_custom_call.1} parent=1 // pred_fallthru
      _
    %382 = vsyncpa [#allocation3], 1

</llo_original>
